<compile_context>
chip_gen: v5e
topology: v5e:2x2
jax: 0.10.0
libtpu: 0.0.40
codegen_flags: <defaults>
</compile_context>

<pallas_src>
import functools

import jax
import jax.numpy as jnp
from jax.experimental import pallas as pl
from jax.experimental.pallas import tpu as pltpu


def _mean_readout_kernel(batch_ref, x_ref, out_ref, acc_ref, cnt_ref):
    # batch_ref: (1, TN) int32      x_ref: (TN, TF)
    # out_ref:   (G_pad, TF)        acc_ref: (G_pad, TF) f32, cnt_ref: (G_pad, 1) f32
    k = pl.program_id(1)  # reduction (node-tile) index, last grid axis

    @pl.when(k == 0)
    def _init():
        acc_ref[...] = jnp.zeros_like(acc_ref)
        cnt_ref[...] = jnp.zeros_like(cnt_ref)

    batch = batch_ref[...]                                    # (1, TN) int32
    g_pad = acc_ref.shape[0]
    tn = batch.shape[1]

    # Per-tile one-hot membership: onehot[g, n] = 1 iff batch[n] == g.
    # Padded nodes carry batch == -1 and match nothing.
    graph_ids = jax.lax.broadcasted_iota(jnp.int32, (g_pad, tn), 0)
    hit = graph_ids == batch                                  # (G_pad, TN) bool

    # Segment-sum on the MXU in x's native dtype; f32 accumulation.
    onehot = hit.astype(x_ref.dtype)
    acc_ref[...] += jnp.dot(onehot, x_ref[...],
                            preferred_element_type=jnp.float32)
    # Per-graph node counts (exact in f32), XLU lane reduction.
    cnt_ref[...] += jnp.sum(hit.astype(jnp.float32), axis=-1, keepdims=True)

    @pl.when(k == pl.num_programs(1) - 1)
    def _finalize():
        cnt = jnp.maximum(cnt_ref[...], 1.0)                  # empty graph -> 0
        inv = pl.reciprocal(cnt, approx=True)                 # EUP slot
        inv = inv * (2.0 - cnt * inv)                         # Newton step -> ~f32 exact
        out_ref[...] = (acc_ref[...] * inv).astype(out_ref.dtype)


def _round_up(x: int, m: int) -> int:
    return (x + m - 1) // m * m


@functools.partial(jax.jit, static_argnames=("num_graphs",))
def mean_readout(x: jax.Array, batch: jax.Array, num_graphs: int) -> jax.Array:
    """Pallas TPU implementation of MeanReadOut.forward (global_mean_pool)."""
    N, F = x.shape
    out_dtype = x.dtype

    # Lane/sublane-dense padded sizes.
    g_pad = max(_round_up(num_graphs, 8), 8)          # sublane-aligned output rows
    f_pad = _round_up(F, 128)                         # lane-dense feature axis
    tn = min(1024, _round_up(N, 256))                 # MXU-friendly node tile
    n_pad = _round_up(N, tn)
    if f_pad % 512 == 0:
        tf = 512
    elif f_pad % 256 == 0:
        tf = 256
    else:
        tf = 128

    # Pad inputs. Padded nodes get batch id -1 (matches no graph).
    x_p = jnp.pad(x, ((0, n_pad - N), (0, f_pad - F)))
    batch_p = jnp.full((1, n_pad), -1, dtype=jnp.int32)
    batch_p = batch_p.at[0, :N].set(batch.astype(jnp.int32))

    grid = (f_pad // tf, n_pad // tn)                 # (parallel F, reduction N)

    out_padded = pl.pallas_call(
        _mean_readout_kernel,
        out_shape=jax.ShapeDtypeStruct((g_pad, f_pad), out_dtype),
        grid_spec=pltpu.PrefetchScalarGridSpec(
            num_scalar_prefetch=0,
            grid=grid,
            in_specs=[
                pl.BlockSpec((1, tn), lambda f, k: (0, k)),      # batch tile
                pl.BlockSpec((tn, tf), lambda f, k: (k, f)),     # x tile
            ],
            out_specs=pl.BlockSpec((g_pad, tf), lambda f, k: (0, f)),
            scratch_shapes=[
                pltpu.VMEM((g_pad, tf), jnp.float32),            # sum accumulator
                pltpu.VMEM((g_pad, 1), jnp.float32),             # count accumulator
            ],
        ),
        compiler_params=pltpu.CompilerParams(
            dimension_semantics=("parallel", "arbitrary"),
            vmem_limit_bytes=48 * 1024 * 1024,  # headroom for v7x's 64 MiB VMEM
        ),
    )(batch_p, x_p)

    return out_padded[:num_graphs, :F]


class MeanReadOut:
    """JAX mirror of the PyTorch MeanReadOut module (no learned parameters)."""

    def __init__(self, in_channels: int, **kwargs):
        self.out_dim = in_channels

    def __call__(self, x: jax.Array, batch: jax.Array, num_graphs: int) -> jax.Array:
        return mean_readout(x, batch, num_graphs)


def _reference(x, batch, num_graphs):
    seg_sum = jax.ops.segment_sum(x.astype(jnp.float32), batch,
                                  num_segments=num_graphs)
    seg_cnt = jax.ops.segment_sum(jnp.ones((x.shape[0], 1), jnp.float32), batch,
                                  num_segments=num_graphs)
    return (seg_sum / jnp.maximum(seg_cnt, 1.0)).astype(x.dtype)


if __name__ == "__main__":
    key = jax.random.PRNGKey(0)

    # Test 1: small synthetic graph batch (matches the module's typical use).
    N1, F1, G1 = 16, 32, 4
    k1, k2, k3 = jax.random.split(key, 3)
    x1 = jax.random.normal(k1, (N1, F1), dtype=jnp.float32)
    batch1 = jnp.array([0, 0, 0, 0, 1, 1, 1, 2, 2, 2, 2, 2, 3, 3, 3, 3],
                       dtype=jnp.int32)

    module = MeanReadOut(in_channels=F1)
    out1 = jax.block_until_ready(module(x1, batch1, num_graphs=G1))
    ref1 = _reference(x1, batch1, G1)
    assert out1.shape == (G1, F1)
    assert jnp.allclose(out1, ref1, atol=1e-4, rtol=1e-4), "test1 mismatch"

    # Test 2: multi-tile grid (N spans several node tiles, F spans one 256 tile,
    # includes an empty graph) to exercise the accumulate / finalize path.
    N2, F2, G2 = 2300, 200, 7
    x2 = jax.random.normal(k2, (N2, F2), dtype=jnp.float32)
    batch2 = jnp.sort(jax.random.randint(k3, (N2,), 0, G2 - 1))  # graph G2-1 empty
    out2 = jax.block_until_ready(mean_readout(x2, batch2, num_graphs=G2))
    ref2 = _reference(x2, batch2, G2)
    assert out2.shape == (G2, F2)
    assert jnp.allclose(out2, ref2, atol=1e-4, rtol=1e-4), "test2 mismatch"

    print("KERNEL_OK")
</pallas_src>

<mosaic_0001>
module attributes {stable_mosaic.version = 11 : i64} {
  func.func @_mean_readout_kernel(%arg0: i32, %arg1: i32, %arg2: memref<1x256xi32, #tpu.memory_space<vmem>>, %arg3: memref<256x128xf32, #tpu.memory_space<vmem>>, %arg4: memref<8x128xf32, #tpu.memory_space<vmem>>, %arg5: memref<8x128xf32, #tpu.memory_space<vmem>>, %arg6: memref<8x1xf32, #tpu.memory_space<vmem>>) attributes {dimension_semantics = [#tpu.dimension_semantics<parallel>, #tpu.dimension_semantics<arbitrary>], iteration_bounds = array<i64: 1, 1>, scalar_prefetch = 0 : i64, scratch_operands = 2 : i64, tpu.core_type = #tpu.core_type<tc>, window_params = [{transform_indices = @transform_0, window_bounds = array<i64: 1, 256>}, {transform_indices = @transform_1, window_bounds = array<i64: 256, 128>}, {transform_indices = @transform_2, window_bounds = array<i64: 8, 128>}]} {
    %c0_i32 = arith.constant 0 : i32
    %0 = arith.cmpi eq, %arg1, %c0_i32 : i32
    %1 = arith.extui %0 : i1 to i32
    %c0_i32_0 = arith.constant 0 : i32
    %2 = arith.cmpi ne, %1, %c0_i32_0 : i32
    scf.if %2 {
      %cst_15 = arith.constant 0.000000e+00 : f32
      %24 = vector.broadcast %cst_15 : f32 to vector<8x128xf32>
      %c0_16 = arith.constant 0 : index
      %c0_17 = arith.constant 0 : index
      %25 = vector.load %arg5[%c0_16, %c0_17] : memref<8x128xf32, #tpu.memory_space<vmem>>, vector<8x128xf32>
      tpu.vector_store %arg5[%c0_16, %c0_17], %24 {strides = array<i32>} : memref<8x128xf32, #tpu.memory_space<vmem>>, vector<8x128xf32>,
      %cst_18 = arith.constant 0.000000e+00 : f32
      %26 = vector.broadcast %cst_18 : f32 to vector<8x1xf32>
      %c0_19 = arith.constant 0 : index
      %c0_20 = arith.constant 0 : index
      %27 = vector.load %arg6[%c0_19, %c0_20] : memref<8x1xf32, #tpu.memory_space<vmem>>, vector<8x1xf32>
      tpu.vector_store %arg6[%c0_19, %c0_20], %26 {strides = array<i32>} : memref<8x1xf32, #tpu.memory_space<vmem>>, vector<8x1xf32>,
    } else {
    }
    %c0 = arith.constant 0 : index
    %c0_1 = arith.constant 0 : index
    %3 = vector.load %arg2[%c0, %c0_1] : memref<1x256xi32, #tpu.memory_space<vmem>>, vector<1x256xi32>
    %4 = tpu.iota {dimensions = array<i32: 0>} : vector<8x256xi32>
    %5 = vector.broadcast %3 : vector<1x256xi32> to vector<8x256xi32>
    %6 = arith.cmpi eq, %4, %5 : vector<8x256xi32>
    %7 = arith.extui %6 : vector<8x256xi1> to vector<8x256xi32>
    %8 = arith.sitofp %7 : vector<8x256xi32> to vector<8x256xf32>
    %c0_2 = arith.constant 0 : index
    %c0_3 = arith.constant 0 : index
    %9 = vector.load %arg5[%c0_2, %c0_3] : memref<8x128xf32, #tpu.memory_space<vmem>>, vector<8x128xf32>
    %c0_4 = arith.constant 0 : index
    %c0_5 = arith.constant 0 : index
    %10 = vector.load %arg3[%c0_4, %c0_5] : memref<256x128xf32, #tpu.memory_space<vmem>>, vector<256x128xf32>
    %cst = arith.constant dense<0.000000e+00> : vector<8x128xf32>
    %11 = tpu.matmul %8, %10, %cst {dimension_numbers = #tpu.dot_dimension_numbers<[1], [0], [0], [1], [0, 0, 1, 1], [], []>} : vector<8x256xf32>, vector<256x128xf32>, vector<8x128xf32> -> vector<8x128xf32>
    %12 = arith.addf %9, %11 : vector<8x128xf32>
    %c0_6 = arith.constant 0 : index
    %c0_7 = arith.constant 0 : index
    %13 = vector.load %arg5[%c0_6, %c0_7] : memref<8x128xf32, #tpu.memory_space<vmem>>, vector<8x128xf32>
    tpu.vector_store %arg5[%c0_6, %c0_7], %12 {strides = array<i32>} : memref<8x128xf32, #tpu.memory_space<vmem>>, vector<8x128xf32>,
    %c0_8 = arith.constant 0 : index
    %c0_9 = arith.constant 0 : index
    %14 = vector.load %arg6[%c0_8, %c0_9] : memref<8x1xf32, #tpu.memory_space<vmem>>, vector<8x1xf32>
    %15 = arith.extui %6 : vector<8x256xi1> to vector<8x256xi32>
    %16 = arith.sitofp %15 : vector<8x256xi32> to vector<8x256xf32>
    %cst_10 = arith.constant dense<0.000000e+00> : vector<8xf32>
    %17 = vector.multi_reduction <add>, %16, %cst_10 [1] : vector<8x256xf32> to vector<8xf32>
    %18 = vector.shape_cast %17 : vector<8xf32> to vector<8x1xf32>
    %19 = arith.addf %14, %18 : vector<8x1xf32>
    %c0_11 = arith.constant 0 : index
    %c0_12 = arith.constant 0 : index
    %20 = vector.load %arg6[%c0_11, %c0_12] : memref<8x1xf32, #tpu.memory_space<vmem>>, vector<8x1xf32>
    tpu.vector_store %arg6[%c0_11, %c0_12], %19 {strides = array<i32>} : memref<8x1xf32, #tpu.memory_space<vmem>>, vector<8x1xf32>,
    %c0_i32_13 = arith.constant 0 : i32
    %21 = arith.cmpi eq, %arg1, %c0_i32_13 : i32
    %22 = arith.extui %21 : i1 to i32
    %c0_i32_14 = arith.constant 0 : i32
    %23 = arith.cmpi ne, %22, %c0_i32_14 : i32
    scf.if %23 {
      %c0_15 = arith.constant 0 : index
      %c0_16 = arith.constant 0 : index
      %24 = vector.load %arg6[%c0_15, %c0_16] : memref<8x1xf32, #tpu.memory_space<vmem>>, vector<8x1xf32>
      %cst_17 = arith.constant 1.000000e+00 : f32
      %25 = vector.broadcast %cst_17 : f32 to vector<8x1xf32>
      %26 = arith.maximumf %24, %25 : vector<8x1xf32>
      %27 = tpu.reciprocal %26 {approx = true} : vector<8x1xf32> -> vector<8x1xf32>
      %28 = arith.mulf %26, %27 : vector<8x1xf32>
      %cst_18 = arith.constant 2.000000e+00 : f32
      %29 = vector.broadcast %cst_18 : f32 to vector<8x1xf32>
      %30 = arith.subf %29, %28 : vector<8x1xf32>
      %31 = arith.mulf %27, %30 : vector<8x1xf32>
      %c0_19 = arith.constant 0 : index
      %c0_20 = arith.constant 0 : index
      %32 = vector.load %arg5[%c0_19, %c0_20] : memref<8x128xf32, #tpu.memory_space<vmem>>, vector<8x128xf32>
      %33 = vector.broadcast %31 : vector<8x1xf32> to vector<8x128xf32>
      %34 = arith.mulf %32, %33 : vector<8x128xf32>
      %c0_21 = arith.constant 0 : index
      %c0_22 = arith.constant 0 : index
      %35 = vector.load %arg4[%c0_21, %c0_22] : memref<8x128xf32, #tpu.memory_space<vmem>>, vector<8x128xf32>
      tpu.vector_store %arg4[%c0_21, %c0_22], %34 {strides = array<i32>} : memref<8x128xf32, #tpu.memory_space<vmem>>, vector<8x128xf32>,
    } else {
    }
    return
  }
  func.func @transform_0(%arg0: i32, %arg1: i32) -> (i32, i32) {
    %c0_i32 = arith.constant 0 : i32
    %c0_i32_0 = arith.constant 0 : i32
    return %c0_i32, %arg1 : i32, i32
  }
  func.func @transform_1(%arg0: i32, %arg1: i32) -> (i32, i32) {
    %c0_i32 = arith.constant 0 : i32
    return %arg1, %arg0 : i32, i32
  }
  func.func @transform_2(%arg0: i32, %arg1: i32) -> (i32, i32) {
    %c0_i32 = arith.constant 0 : i32
    %c0_i32_0 = arith.constant 0 : i32
    return %c0_i32, %arg0 : i32, i32
  }
}

</mosaic_0001>

<llo_original>
// kernel: mean_readout.1
$region0: #{mean_readout.1}
  #allocation0 [shape = 'u32[]', space=smem, size = 0x4, offset = 0x4, fixed_abs, tag = 'smem constant byte address 0x4 - core index']
  #allocation1 [shape = 'u32[72,128]{1,0:T(1,128)}', space=vmem, size = 0x9000, scoped, tag = 'internal scratch']
  #allocation2 [shape = 'f32[8,128]{1,0:T(8,128)}', space=vmem, size = 0x1000, scoped, tag = 'scratch operand']
  #allocation3 [shape = 'f32[8,1]{1,0:T(8,128)}', space=vmem, size = 0x1000, scoped, tag = 'scratch operand']
  %s0 = inlined_call_operand.vmem [shape: s32[1,256], index: 0, kind: input, shape index: {}]
  %s1 = inlined_call_operand.vmem [shape: f32[256,128], index: 1, kind: input, shape index: {}]
  %s2 = inlined_call_operand.vmem [shape: f32[8,128], index: 2, kind: output, shape index: {}]
  %s3 = sld [smem:[#allocation0]]
  $region26: #{mean_readout.1} parent=0
    _
  %s5 = ssub.s32 1, %s3
  %s6 = scalar_select 0, %s5, %s3
  // Predicated region
  $region2: #{mean_readout.1} parent=0 // pred_check
    _
  $region3: #{mean_readout.1} parent=0 // pred_check_branch
    %8 = sbr.rel (0) target = $region5
  $region4: #{mean_readout.1} parent=0 // pred_region
    _
  $region5: #{mean_readout.1} parent=0 // pred_fallthru
    _
  // Predicated region
  $region6: #{mean_readout.1} parent=0 // pred_check
    _
  $region7: #{mean_readout.1} parent=0 // pred_check_branch
    %10 = sbr.rel (0) target = $region9
  $region8: #{mean_readout.1} parent=0 // pred_region
    _
  $region9: #{mean_readout.1} parent=0 // pred_fallthru
    _
  %p11 = scmp.eq.s32.totalorder 0, 0
  // Predicated region
  $region10: #{mean_readout.1} parent=0 // pred_check
    %p12 = pneg %p11
  $region11: #{mean_readout.1} parent=0 // pred_check_branch
    %14 = sbr.rel (%p12) target = $region13
  $region12: #{mean_readout.1} parent=0 // pred_region
    %15 = vst [vmem:[#allocation2] sm:$0xff] 0.0
    %vm16 = vcmask 7168
    %17 = vst.msk [vmem:[#allocation3] sm:$0xff] %vm16, 0.0
  $region13: #{mean_readout.1} parent=0 // pred_fallthru
    _
  %v18 = vld [vmem:[%s0] sm:$0x3]
  %v19 = vlaneseq
  %v20 = vshrl.u32 %v19, 7
  %v21 = vperm.slane %v18, 0
  %v22 = vperm.slane %v18, 1
  %vm23 = vcmp.eq.s32.totalorder %v20, %v21
  %vm24 = vcmp.eq.s32.totalorder %v20, %v22
  %v25 = vsel %vm23, 1, 0
  %v26 = vsel %vm24, 1, 0
  %v27 = vcvt.s32.f32 %v25
  %v28 = vcvt.s32.f32 %v26
  %v29 = vld [vmem:[#allocation2] sm:$0xff]
  %v30 = vld [vmem:[%s1] sm:$0xff]
  %v31 = vld [vmem:[%s1 + $0x8] sm:$0xff]
  %v32 = vld [vmem:[%s1 + $0x10] sm:$0xff]
  %v33 = vld [vmem:[%s1 + $0x18] sm:$0xff]
  %v34 = vld [vmem:[%s1 + $0x20] sm:$0xff]
  %v35 = vld [vmem:[%s1 + $0x28] sm:$0xff]
  %v36 = vld [vmem:[%s1 + $0x30] sm:$0xff]
  %v37 = vld [vmem:[%s1 + $0x38] sm:$0xff]
  %v38 = vld [vmem:[%s1 + $0x40] sm:$0xff]
  %v39 = vld [vmem:[%s1 + $0x48] sm:$0xff]
  %v40 = vld [vmem:[%s1 + $0x50] sm:$0xff]
  %v41 = vld [vmem:[%s1 + $0x58] sm:$0xff]
  %v42 = vld [vmem:[%s1 + $0x60] sm:$0xff]
  %v43 = vld [vmem:[%s1 + $0x68] sm:$0xff]
  %v44 = vld [vmem:[%s1 + $0x70] sm:$0xff]
  %v45 = vld [vmem:[%s1 + $0x78] sm:$0xff]
  %v46 = vld [vmem:[%s1 + $0x80] sm:$0xff]
  %v47 = vld [vmem:[%s1 + $0x88] sm:$0xff]
  %v48 = vld [vmem:[%s1 + $0x90] sm:$0xff]
  %v49 = vld [vmem:[%s1 + $0x98] sm:$0xff]
  %v50 = vld [vmem:[%s1 + $0xa0] sm:$0xff]
  %v51 = vld [vmem:[%s1 + $0xa8] sm:$0xff]
  %v52 = vld [vmem:[%s1 + $0xb0] sm:$0xff]
  %v53 = vld [vmem:[%s1 + $0xb8] sm:$0xff]
  %v54 = vld [vmem:[%s1 + $0xc0] sm:$0xff]
  %v55 = vld [vmem:[%s1 + $0xc8] sm:$0xff]
  %v56 = vld [vmem:[%s1 + $0xd0] sm:$0xff]
  %v57 = vld [vmem:[%s1 + $0xd8] sm:$0xff]
  %v58 = vld [vmem:[%s1 + $0xe0] sm:$0xff]
  %v59 = vld [vmem:[%s1 + $0xe8] sm:$0xff]
  %v60 = vld [vmem:[%s1 + $0xf0] sm:$0xff]
  %v61 = vld [vmem:[%s1 + $0xf8] sm:$0xff]
  %62 = vmatpush.msra.mxu0 %v45
  %63 = vmatpush.msra.mxu0 %v44
  %64 = vmatpush.msra.mxu0 %v43
  %65 = vmatpush.msra.mxu0 %v42
  %66 = vmatpush.msra.mxu0 %v41
  %67 = vmatpush.msra.mxu0 %v40
  %68 = vmatpush.msra.mxu0 %v39
  %69 = vmatpush.msra.mxu0 %v38
  %70 = vmatpush.msra.mxu0 %v37
  %71 = vmatpush.msra.mxu0 %v36
  %72 = vmatpush.msra.mxu0 %v35
  %73 = vmatpush.msra.mxu0 %v34
  %74 = vmatpush.msra.mxu0 %v33
  %75 = vmatpush.msra.mxu0 %v32
  %76 = vmatpush.msra.mxu0 %v31
  %77 = vmatpush.msra.mxu0 %v30
  %78 = vmatmul.f32.gmra.mxu0 %v27
  %v79 = vpop.f32.mrf.mxu0
  %v80 = vadd.f32 0.0, %v79
  %81 = vdwg.mxu0
  %82 = vmatpush.msra.mxu0 %v61
  %83 = vmatpush.msra.mxu0 %v60
  %84 = vmatpush.msra.mxu0 %v59
  %85 = vmatpush.msra.mxu0 %v58
  %86 = vmatpush.msra.mxu0 %v57
  %87 = vmatpush.msra.mxu0 %v56
  %88 = vmatpush.msra.mxu0 %v55
  %89 = vmatpush.msra.mxu0 %v54
  %90 = vmatpush.msra.mxu0 %v53
  %91 = vmatpush.msra.mxu0 %v52
  %92 = vmatpush.msra.mxu0 %v51
  %93 = vmatpush.msra.mxu0 %v50
  %94 = vmatpush.msra.mxu0 %v49
  %95 = vmatpush.msra.mxu0 %v48
  %96 = vmatpush.msra.mxu0 %v47
  %97 = vmatpush.msra.mxu0 %v46
  %98 = vmatmul.f32.gmra.mxu0 %v28
  %v99 = vpop.f32.mrf.mxu0
  %v100 = vadd.f32 %v80, %v99
  %101 = vdwg.mxu0
  %v102 = vadd.f32 %v29, %v100
  %103 = vst [vmem:[#allocation2] sm:$0xff] %v102
  %v104 = vld [vmem:[#allocation3] sm:$0xff]
  %v105 = vadd.f32 %v27, %v28
  %106 = vadd.xlane.f32.xlu0 %v105
  %v107 = vpop.xlane.xlu0 %106
  %v108 = vadd.f32 %v104, %v107
  %vm109 = vcmask 7168
  %110 = vst.msk [vmem:[#allocation3] sm:$0xff] %vm109, %v108
  // Predicated region
  $region14: #{mean_readout.1} parent=0 // pred_check
    %p111 = pneg %p11
  $region15: #{mean_readout.1} parent=0 // pred_check_branch
    %113 = sbr.rel (%p111) target = $region17
  $region16: #{mean_readout.1} parent=0 // pred_region
    %v114 = vld [vmem:[#allocation3] sm:$0xff]
    %v115 = vmax.f32 %v114, 1.0
    %v116 = vrcp.pop %v115
    %v117 = vmul.f32 %v115, %v116
    %v118 = vsub.f32 2.0, %v117
    %v119 = vmul.f32 %v116, %v118
    %v120 = vld [vmem:[#allocation2] sm:$0xff]
    %122 = vset.pattern.permute.xlu0 0
    %123 = vperm.xlu0 %122, %v119
    %v124 = vpop.permute.xlu0 %123
    %v126 = vmul.f32 %v120, %v124
    %127 = vst [vmem:[%s2] sm:$0xff] %v126
  $region17: #{mean_readout.1} parent=0 // pred_fallthru
    _
  // Predicated region
  $region18: #{mean_readout.1} parent=0 // pred_check
    _
  $region19: #{mean_readout.1} parent=0 // pred_check_branch
    %129 = sbr.rel (0) target = $region21
  $region20: #{mean_readout.1} parent=0 // pred_region
    _
  $region21: #{mean_readout.1} parent=0 // pred_fallthru
    _
  // Predicated region
  $region22: #{mean_readout.1} parent=0 // pred_check
    _
  $region23: #{mean_readout.1} parent=0 // pred_check_branch
    %131 = sbr.rel (0) target = $region25
  $region24: #{mean_readout.1} parent=0 // pred_region
    _
  $region25: #{mean_readout.1} parent=0 // pred_fallthru
    _

</llo_original>
